<compile_context>
chip_gen: v5e
topology: v5e:2x2
jax: 0.10.0
libtpu: 0.0.40
codegen_flags: <defaults>
</compile_context>

<pallas_src>
import functools

import numpy as np
import jax
import jax.numpy as jnp
from jax.experimental import pallas as pl
from jax.experimental.pallas import tpu as pltpu


def _round_up(v, m):
    return (v + m - 1) // m * m


def _cdiv(a, b):
    return -(-a // b)


def _raconv_fused_kernel(x1_ref, xh_ref, w_ref, b_ref, o_ref, *,
                         K, Wp, stride, Cout, summary, TM):
    """One (sample, column-tile) grid step.

    x1 : (1, C, B)    bf16 -- lane tile of the flattened, zero-padded input.
    xh : (1, C, HALO) bf16 -- halo block starting right after x1's tile.
    w  : (R, K*K*C)   bf16 -- stacked per-tap weights, (ki, kj, c)-major; row
         Cout is all-ones for 'avg' (patch sum), zeros for 'max'.
    b  : (R, 1)  f32 -- bias (0 in row Cout and padded rows).
    o  : (1, R, TM) f32 -- rows [0, Cout) = conv columns, row Cout = raw
         summary value (patch sum for 'avg', patch max for 'max').
    """
    xwin = jnp.concatenate([x1_ref[0], xh_ref[0]], axis=-1)     # (C, B + HALO)
    slabs = []
    for ki in range(K):
        for kj in range(K):
            off = ki * Wp + kj
            # TODO(synk): for stride > 1 this is a strided lane slice
            # (XLU-heavy and untested); pre-compact the stride phases on the
            # host before relying on that path.  Only stride == 1 is exercised
            # by the demo below.
            slabs.append(xwin[:, off: off + stride * (TM - 1) + 1: stride])
    stacked = jnp.concatenate(slabs, axis=0)                    # (K*K*C, TM)
    out = jnp.dot(w_ref[...], stacked,
                  preferred_element_type=jnp.float32) + b_ref[...]
    o_ref[0] = out
    if summary == 'max':
        smax = jnp.max(stacked, axis=0, keepdims=True)          # bf16 (1, TM)
        o_ref[0, Cout:Cout + 1, :] = smax.astype(jnp.float32)


def _rep_indices(s):
    """rep[j] = min{k : s[k] == s[j]} (first-occurrence representative).

    Sort-based O(L log L) replacement for an (L, L) equality mask.
    """
    L = s.shape[0]
    pos = jnp.arange(L, dtype=jnp.int32)
    order = jnp.argsort(s, stable=True).astype(jnp.int32)
    s_sorted = jnp.take(s, order)
    is_new = jnp.concatenate(
        [jnp.ones((1,), dtype=bool), s_sorted[1:] != s_sorted[:-1]])
    run_start = jax.lax.cummax(jnp.where(is_new, pos, 0), axis=0)
    rep_sorted = jnp.take(order, run_start)
    return jnp.zeros((L,), jnp.int32).at[order].set(rep_sorted)


def raconv_forward(x, weight, bias, K, stride, padding, summary, scale_factor,
                   *, tile_m=1024, compute_dtype=jnp.bfloat16, return_aux=False):
    if summary not in ('avg', 'max'):
        raise ValueError('The summary type is invalid.')
    N, C, H, W = x.shape
    Cout = weight.shape[0]
    KK = K * K
    KKC = KK * C                       # stacked contraction length (= patch size)
    P = KKC
    Hp, Wp = H + 2 * padding, W + 2 * padding
    Hout = (Hp - K) // stride + 1
    Wout = (Wp - K) // stride + 1
    L = Hout * Wout
    Mwide = Hout * Wp                  # "wide" columns: every wo in [0, Wp)
    R = _round_up(Cout + 1, 8)         # conv rows + 1 summary row, 8-aligned

    off_max = (K - 1) * Wp + (K - 1)
    HALO = _round_up(off_max + 1, 128)  # halo lanes needed past a tile boundary

    # Lane tile: multiple of HALO so the halo block's index_map is exact.
    TM = min(int(tile_m), _round_up(Mwide, 128))
    TM = max(_round_up(TM, HALO), HALO)

    def vmem_estimate(tm):
        b = stride * tm
        return (2 * C * b * 2 + 2 * C * HALO * 2            # x1 / halo double buffers
                + 2 * R * KKC * 2 + 2 * R * 4                # weights + bias
                + 2 * R * tm * 4                             # output double buffer
                + C * (b + HALO) * 2 + KKC * tm * 2 + R * tm * 4)  # in-kernel temps

    # Keep the per-step footprint v7x-safe (64 MiB physical VMEM).
    while TM > HALO and vmem_estimate(TM) > 40 * 1024 * 1024:
        TM = max(_round_up(TM // 2, HALO), HALO)

    n_tiles = _cdiv(Mwide, TM)
    B = stride * TM
    halo_step = B // HALO

    # Flattened, zero-padded input; each lane block is DMA'd once (+ one
    # HALO block per tile) by the kernel.
    # TODO(synk): fold the spatial zero-padding into the kernel (masked
    # boundary reads) to drop this wrapper-side HBM round trip.
    xq = x.astype(compute_dtype)
    xpad = jnp.pad(xq, ((0, 0), (0, 0), (padding, padding), (padding, padding)))
    lx = max(Hp * Wp, n_tiles * B + HALO)
    xflat = jnp.pad(xpad.reshape(N, C, Hp * Wp),
                    ((0, 0), (0, 0), (0, lx - Hp * Wp)))

    # Stacked weights, (ki, kj, c)-major, with the summary row folded in.
    w4 = weight.reshape(Cout, C, K, K)
    wkkc = jnp.transpose(w4, (0, 2, 3, 1)).reshape(Cout, KKC).astype(compute_dtype)
    extra = jnp.zeros((R - Cout, KKC), compute_dtype)
    if summary == 'avg':
        extra = extra.at[0, :].set(1.0)              # row Cout -> patch sum
    wk = jnp.concatenate([wkkc, extra], axis=0)      # (R, KKC)
    bfull = jnp.zeros((R, 1), jnp.float32).at[:Cout, 0].set(
        bias.reshape(-1).astype(jnp.float32))

    kernel = functools.partial(_raconv_fused_kernel, K=K, Wp=Wp, stride=stride,
                               Cout=Cout, summary=summary, TM=TM)
    vmem_limit = int(min(64 * 1024 * 1024,
                         max(32 * 1024 * 1024, 2 * vmem_estimate(TM))))
    fullwide = pl.pallas_call(
        kernel,
        out_shape=jax.ShapeDtypeStruct((N, R, n_tiles * TM), jnp.float32),
        grid_spec=pltpu.PrefetchScalarGridSpec(
            num_scalar_prefetch=0,
            grid=(N, n_tiles),
            in_specs=[
                pl.BlockSpec((1, C, B), lambda n, t: (n, 0, t)),
                pl.BlockSpec((1, C, HALO),
                             lambda n, t: (n, 0, (t + 1) * halo_step)),
                pl.BlockSpec((R, KKC), lambda n, t: (0, 0)),
                pl.BlockSpec((R, 1), lambda n, t: (0, 0)),
            ],
            out_specs=pl.BlockSpec((1, R, TM), lambda n, t: (n, 0, t))),
        compiler_params=pltpu.CompilerParams(
            dimension_semantics=("parallel", "parallel"),
            vmem_limit_bytes=vmem_limit),
    )(xflat, xflat, wk, bfull)

    # Drop padded / invalid wide columns; split conv rows vs. summary row.
    fw = fullwide[:, :, :Mwide].reshape(N, R, Hout, Wp)[:, :, :, :Wout]
    conv = fw[:, :Cout].reshape(N, Cout, L)
    srow = fw[:, Cout].reshape(N, L)
    if summary == 'avg':
        summ = ((srow / float(P)) * scale_factor).astype(jnp.int32)
    else:
        summ = (srow * scale_factor).astype(jnp.int32)

    # TODO(synk): unique/first-occurrence dedup + representative gather is
    # data-dependent; kept as sort-based JAX glue (no clean static Pallas tiling).
    rep = jax.vmap(_rep_indices)(summ)                          # (N, L) int32
    out_cols = jax.vmap(lambda f, r: jnp.take(f, r, axis=1))(conv, rep)
    out = out_cols.reshape(N, Cout, Hout, Wout)
    if return_aux:
        return out, summ
    return out


def _unfold_nchw_np(x, K, stride, padding):
    """NumPy reference of torch.nn.functional.unfold (channel-major, ki, kj)."""
    N, C, H, W = x.shape
    Hout = (H + 2 * padding - K) // stride + 1
    Wout = (W + 2 * padding - K) // stride + 1
    xp = np.pad(x, ((0, 0), (0, 0), (padding, padding), (padding, padding)))
    cols = []
    for c in range(C):
        for ki in range(K):
            for kj in range(K):
                win = xp[:, c, ki:ki + stride * Hout:stride,
                         kj:kj + stride * Wout:stride]
                cols.append(win.reshape(N, Hout * Wout))
    return np.stack(cols, axis=1).astype(np.float32), Hout, Wout


if __name__ == "__main__":
    key = jax.random.PRNGKey(0)
    N, Cin, H, W = 2, 4, 16, 16
    Cout, K, stride, padding = 8, 3, 1, 1
    scale_factor = 10.0

    k1, k2, k3 = jax.random.split(key, 3)
    x = jax.random.normal(k1, (N, Cin, H, W), dtype=jnp.float32)
    weight = 0.1 * jax.random.normal(k2, (Cout, Cin, K, K), dtype=jnp.float32)
    bias = 0.1 * jax.random.normal(k3, (Cout,), dtype=jnp.float32)

    # Reference operands, rounded to bf16 exactly as the kernel consumes them.
    xq = np.asarray(x.astype(jnp.bfloat16).astype(jnp.float32))
    wq = np.asarray(weight.astype(jnp.bfloat16).astype(jnp.float32))
    b_np = np.asarray(bias, dtype=np.float32).reshape(Cout, 1)
    patches_np, Hout, Wout = _unfold_nchw_np(xq, K, stride, padding)
    w2 = wq.reshape(Cout, Cin * K * K)

    for summary in ('avg', 'max'):
        out, summ = raconv_forward(x, weight, bias, K, stride, padding,
                                   summary, scale_factor, return_aux=True)
        out = jax.block_until_ready(out)
        summ_np = np.asarray(summ)

        # NumPy reference reproducing the PyTorch unique / addmm / index_select
        # path, using the kernel-produced summaries (same dataflow as torch).
        ref = np.empty((N, Cout, Hout * Wout), dtype=np.float32)
        for i in range(N):
            _, ui, di = np.unique(summ_np[i], return_index=True,
                                  return_inverse=True)
            ref[i] = (b_np + w2 @ patches_np[i][:, ui])[:, di]
        ref = ref.reshape(N, Cout, Hout, Wout)

        assert np.allclose(np.asarray(out), ref, rtol=1e-4, atol=1e-4), \
            f"Pallas RAConv output mismatch vs reference (summary={summary})"

    print("KERNEL_OK")
</pallas_src>

<mosaic_0001>
module attributes {stable_mosaic.version = 11 : i64} {
  func.func @_raconv_fused_kernel(%arg0: i32, %arg1: i32, %arg2: memref<1x4x384xbf16, #tpu.memory_space<vmem>>, %arg3: memref<1x4x128xbf16, #tpu.memory_space<vmem>>, %arg4: memref<16x36xbf16, #tpu.memory_space<vmem>>, %arg5: memref<16x1xf32, #tpu.memory_space<vmem>>, %arg6: memref<1x16x384xf32, #tpu.memory_space<vmem>>) attributes {dimension_semantics = [#tpu.dimension_semantics<parallel>, #tpu.dimension_semantics<parallel>], iteration_bounds = array<i64: 2, 1>, scalar_prefetch = 0 : i64, scratch_operands = 0 : i64, tpu.core_type = #tpu.core_type<tc>, window_params = [{transform_indices = @transform_0, window_bounds = array<i64: 1, 4, 384>}, {transform_indices = @transform_1, window_bounds = array<i64: 1, 4, 128>}, {pipeline_mode = #tpu.pipeline_mode<synchronous>, transform_indices = @transform_2, window_bounds = array<i64: 16, 36>}, {pipeline_mode = #tpu.pipeline_mode<synchronous>, transform_indices = @transform_3, window_bounds = array<i64: 16, 1>}, {transform_indices = @transform_4, window_bounds = array<i64: 1, 16, 384>}]} {
    %c0 = arith.constant 0 : index
    %c0_0 = arith.constant 0 : index
    %c0_1 = arith.constant 0 : index
    %0 = vector.load %arg2[%c0, %c0_0, %c0_1] : memref<1x4x384xbf16, #tpu.memory_space<vmem>>, vector<1x4x384xbf16>
    %1 = vector.shape_cast %0 : vector<1x4x384xbf16> to vector<4x384xbf16>
    %c0_2 = arith.constant 0 : index
    %c0_3 = arith.constant 0 : index
    %c0_4 = arith.constant 0 : index
    %2 = vector.load %arg3[%c0_2, %c0_3, %c0_4] : memref<1x4x128xbf16, #tpu.memory_space<vmem>>, vector<1x4x128xbf16>
    %3 = vector.shape_cast %2 : vector<1x4x128xbf16> to vector<4x128xbf16>
    %4 = tpu.concatenate %1, %3 in 1 : vector<4x384xbf16>, vector<4x128xbf16> -> vector<4x512xbf16>
    %5 = vector.extract_strided_slice %4 {offsets = [0, 0], sizes = [4, 384], strides = [1, 1]} : vector<4x512xbf16> to vector<4x384xbf16>
    %6 = vector.extract_strided_slice %4 {offsets = [0, 1], sizes = [4, 384], strides = [1, 1]} : vector<4x512xbf16> to vector<4x384xbf16>
    %7 = vector.extract_strided_slice %4 {offsets = [0, 2], sizes = [4, 384], strides = [1, 1]} : vector<4x512xbf16> to vector<4x384xbf16>
    %8 = vector.extract_strided_slice %4 {offsets = [0, 18], sizes = [4, 384], strides = [1, 1]} : vector<4x512xbf16> to vector<4x384xbf16>
    %9 = vector.extract_strided_slice %4 {offsets = [0, 19], sizes = [4, 384], strides = [1, 1]} : vector<4x512xbf16> to vector<4x384xbf16>
    %10 = vector.extract_strided_slice %4 {offsets = [0, 20], sizes = [4, 384], strides = [1, 1]} : vector<4x512xbf16> to vector<4x384xbf16>
    %11 = vector.extract_strided_slice %4 {offsets = [0, 36], sizes = [4, 384], strides = [1, 1]} : vector<4x512xbf16> to vector<4x384xbf16>
    %12 = vector.extract_strided_slice %4 {offsets = [0, 37], sizes = [4, 384], strides = [1, 1]} : vector<4x512xbf16> to vector<4x384xbf16>
    %13 = vector.extract_strided_slice %4 {offsets = [0, 38], sizes = [4, 384], strides = [1, 1]} : vector<4x512xbf16> to vector<4x384xbf16>
    %14 = tpu.concatenate %5, %6, %7, %8, %9, %10, %11, %12, %13 in 0 : vector<4x384xbf16>, vector<4x384xbf16>, vector<4x384xbf16>, vector<4x384xbf16>, vector<4x384xbf16>, vector<4x384xbf16>, vector<4x384xbf16>, vector<4x384xbf16>, vector<4x384xbf16> -> vector<36x384xbf16>
    %c0_5 = arith.constant 0 : index
    %c0_6 = arith.constant 0 : index
    %15 = vector.load %arg4[%c0_5, %c0_6] : memref<16x36xbf16, #tpu.memory_space<vmem>>, vector<16x36xbf16>
    %cst = arith.constant dense<0.000000e+00> : vector<16x384xf32>
    %16 = tpu.matmul %15, %14, %cst {dimension_numbers = #tpu.dot_dimension_numbers<[1], [0], [0], [1], [0, 0, 1, 1], [], []>} : vector<16x36xbf16>, vector<36x384xbf16>, vector<16x384xf32> -> vector<16x384xf32>
    %c0_7 = arith.constant 0 : index
    %c0_8 = arith.constant 0 : index
    %17 = vector.load %arg5[%c0_7, %c0_8] : memref<16x1xf32, #tpu.memory_space<vmem>>, vector<16x1xf32>
    %18 = vector.broadcast %17 : vector<16x1xf32> to vector<16x384xf32>
    %19 = arith.addf %16, %18 : vector<16x384xf32>
    %c0_9 = arith.constant 0 : index
    %c0_10 = arith.constant 0 : index
    %c0_11 = arith.constant 0 : index
    %20 = vector.load %arg6[%c0_9, %c0_10, %c0_11] : memref<1x16x384xf32, #tpu.memory_space<vmem>>, vector<1x16x384xf32>
    %21 = vector.shape_cast %20 : vector<1x16x384xf32> to vector<16x384xf32>
    %22 = vector.shape_cast %19 : vector<16x384xf32> to vector<1x16x384xf32>
    tpu.vector_store %arg6[%c0_9, %c0_10, %c0_11], %22 {strides = array<i32>} : memref<1x16x384xf32, #tpu.memory_space<vmem>>, vector<1x16x384xf32>,
    return
  }
  func.func @transform_0(%arg0: i32, %arg1: i32) -> (i32, i32, i32) {
    %c0_i32 = arith.constant 0 : i32
    %c0_i32_0 = arith.constant 0 : i32
    return %arg0, %c0_i32, %arg1 : i32, i32, i32
  }
  func.func @transform_1(%arg0: i32, %arg1: i32) -> (i32, i32, i32) {
    %c1_i32 = arith.constant 1 : i32
    %0 = arith.addi %arg1, %c1_i32 : i32
    %c3_i32 = arith.constant 3 : i32
    %1 = arith.muli %0, %c3_i32 : i32
    %c0_i32 = arith.constant 0 : i32
    %c0_i32_0 = arith.constant 0 : i32
    return %arg0, %c0_i32, %1 : i32, i32, i32
  }
  func.func @transform_2(%arg0: i32, %arg1: i32) -> (i32, i32) {
    %c0_i32 = arith.constant 0 : i32
    %c0_i32_0 = arith.constant 0 : i32
    %c0_i32_1 = arith.constant 0 : i32
    return %c0_i32, %c0_i32_0 : i32, i32
  }
  func.func @transform_3(%arg0: i32, %arg1: i32) -> (i32, i32) {
    %c0_i32 = arith.constant 0 : i32
    %c0_i32_0 = arith.constant 0 : i32
    %c0_i32_1 = arith.constant 0 : i32
    return %c0_i32, %c0_i32_0 : i32, i32
  }
  func.func @transform_4(%arg0: i32, %arg1: i32) -> (i32, i32, i32) {
    %c0_i32 = arith.constant 0 : i32
    %c0_i32_0 = arith.constant 0 : i32
    return %arg0, %c0_i32, %arg1 : i32, i32, i32
  }
}

</mosaic_0001>

<llo_original>
// kernel: tpu_custom_call.1
$region0: #{tpu_custom_call.1}
  #allocation0 [shape = 'u32[]', space=smem, size = 0x4, offset = 0x4, fixed_abs, tag = 'smem constant byte address 0x4 - core index']
  #allocation1 [shape = 'u32[72,128]{1,0:T(1,128)}', space=vmem, size = 0x9000, scoped, tag = 'internal scratch']
  %s0 = inlined_call_operand.vmem [shape: bf16[2,4,512], index: 0, kind: input, shape index: {}]
  %s1 = inlined_call_operand.hbm [shape: bf16[2,4,512], index: 1, kind: input, shape index: {}]
  %s2 = inlined_call_operand.hbm [shape: bf16[16,36], index: 2, kind: input, shape index: {}]
  %s3 = inlined_call_operand.vmem [shape: f32[16,1], index: 3, kind: input, shape index: {}]
  %s4 = inlined_call_operand.hbm [shape: f32[2,16,384], index: 4, kind: output, shape index: {}]
  %s5 = sld [smem:[#allocation0]]
  $region57: #{tpu_custom_call.1} parent=0
    _
  %s7 = ssub.s32 1, %s5
  %s8 = scalar_select 0, %s7, %s5
  $region1: #{tpu_custom_call.1} parent=0
    #allocation2 [shape = 'u8[2048]{0}', space=vmem, size = 0x800, scoped, tag = 'input window, operand 1']
    #allocation3 [shape = 's32[2]{0}', space=sflag, size = 0x8, scoped, tag = 'scoped memory for tpu_custom_call.1']
    #allocation4 [shape = 's32[2]{0}', space=sflag, size = 0x8, scoped, tag = 'scoped memory for tpu_custom_call.1']
    #allocation5 [shape = 'u8[4096]{0}', space=vmem, size = 0x1000, scoped, tag = 'input window, operand 2, single buffered']
    #allocation6 [shape = 's32[1]{0}', space=sflag, size = 0x4, scoped, tag = 'scoped memory for tpu_custom_call.1']
    #allocation7 [shape = 'u8[49152]{0}', space=vmem, size = 0xc000, scoped, tag = 'output window, operand 0']
    %9 = vsyncpa [#allocation3], 0
    %s10 = scalar_lea.sflag [#allocation3], 1
    %11 = vsyncpa %s10, 0
    %12 = vsyncpa [#allocation6], 0
    %13 = vsyncpa [#allocation4], 0
    %s14 = scalar_lea.sflag [#allocation4], 1
    %15 = vsyncpa %s14, 0
    loop: start=0, step=1, limit=4
    $region2: #{tpu_custom_call.1} parent=1 // loop_pre_header
      _
    $region3: #{tpu_custom_call.1} parent=1 // loop_header
      %s17 = sphi 0, %s21
      %p18 = scmp.ge.s32.totalorder %s17, 4
      %s24 = sphi 0, %s36
      %s25 = sphi 0, %s32
      %s26 = sphi 0, %s24
      %s27 = sphi 0, %s25
      %s28 = sphi 0, %s26
      %s29 = sphi 0, %s27
      %s41 = sphi 0, %s43
      %s44 = sphi 0, %s41
      %s45 = sphi 0, %s44
      %s61 = sphi 0, %s45
      %s73 = sphi 0, %s75
      %s76 = sphi 0, %s73
      %s77 = sphi 0, %s76
      %s93 = sphi 0, %s77
      %s97 = sphi 0, %s97
      %s99 = sphi 0, %s97
      %s100 = sphi 0, %s99
      %s114 = sphi 0, %s100
      %s118 = sphi 0, %s118
      %s120 = sphi 0, %s118
      %s121 = sphi 0, %s120
      %s135 = sphi 0, %s121
      %s143 = sphi 0, %s145
      %s146 = sphi 0, %s143
      %s147 = sphi 0, %s146
      %s163 = sphi 0, %s147
    $region4: #{tpu_custom_call.1} parent=1 // loop_header_branch
      %20 = sbr.rel (%p18) target = $region8
    $region5: #{tpu_custom_call.1} parent=1 // loop_body
      %s22 = ssub.s32 %s17, 1
      %s23 = ssub.s32 %s17, 2
      %s30 = sadd.s32 1, %s25
      %p31 = scmp.ge.s32.totalorder %s30, 1
      %s32 = scalar_select %p31, 0, %s30
      %s33 = sadd.s32 1, %s24
      %s34 = scalar_select %p31, %s33, %s24
      %p35 = scmp.ge.s32.totalorder %s34, 2
      %s36 = scalar_select %p35, 0, %s34
      %s37 = ssub.s32 %s24, %s36
      %s38 = ssub.s32 %s25, %s32
      %s39 = sor.u32 %s37, %s38
      %p40 = scmp.eq.s32.totalorder %s39, 0
      %s42 = sadd.s32 %s41, 1
      %s43 = scalar_select %p40, %s41, %s42
      %p46 = pneg %p40
      %p47 = scmp.eq.s32.totalorder %s17, 1
      %p48 = por %p46, %p47
      %p49 = scmp.ne.s32.totalorder %s41, %s44
      %p50 = scmp.eq.s32.totalorder %s17, 0
      %p51 = por %p49, %p50
      %p52 = scmp.ne.s32.totalorder %s41, %s44
      %p53 = scmp.eq.s32.totalorder %s22, 1
      %p54 = por %p52, %p53
      %p55 = scmp.ne.s32.totalorder %s44, %s45
      %p56 = scmp.eq.s32.totalorder %s22, 0
      %p57 = por %p55, %p56
      %p58 = scmp.ne.s32.totalorder %s44, %s45
      %p59 = scmp.eq.s32.totalorder %s23, 1
      %p60 = por %p58, %p59
      %p62 = scmp.ne.s32.totalorder %s45, %s61
      %p63 = scmp.eq.s32.totalorder %s23, 0
      %p64 = por %p62, %p63
      %s65 = sadd.s32 %s25, 1
      %s66 = smul.u32 %s65, 3
      %s67 = sadd.s32 %s32, 1
      %s68 = smul.u32 %s67, 3
      %s69 = ssub.s32 %s24, %s36
      %s70 = ssub.s32 %s66, %s68
      %s71 = sor.u32 %s69, %s70
      %p72 = scmp.eq.s32.totalorder %s71, 0
      %s74 = sadd.s32 %s73, 1
      %s75 = scalar_select %p72, %s73, %s74
      %p78 = pneg %p72
      %p79 = scmp.eq.s32.totalorder %s17, 1
      %p80 = por %p78, %p79
      %p81 = scmp.ne.s32.totalorder %s73, %s76
      %p82 = scmp.eq.s32.totalorder %s17, 0
      %p83 = por %p81, %p82
      %p84 = scmp.ne.s32.totalorder %s73, %s76
      %p85 = scmp.eq.s32.totalorder %s22, 1
      %p86 = por %p84, %p85
      %p87 = scmp.ne.s32.totalorder %s76, %s77
      %p88 = scmp.eq.s32.totalorder %s22, 0
      %p89 = por %p87, %p88
      %p90 = scmp.ne.s32.totalorder %s76, %s77
      %p91 = scmp.eq.s32.totalorder %s23, 1
      %p92 = por %p90, %p91
      %p94 = scmp.ne.s32.totalorder %s77, %s93
      %p95 = scmp.eq.s32.totalorder %s23, 0
      %p96 = por %p94, %p95
      %s98 = sadd.s32 %s97, 1
      %p101 = scmp.eq.s32.totalorder %s17, 1
      %p102 = scmp.ne.s32.totalorder %s97, %s99
      %p103 = scmp.eq.s32.totalorder %s17, 0
      %p104 = por %p102, %p103
      %p105 = scmp.ne.s32.totalorder %s97, %s99
      %p106 = scmp.eq.s32.totalorder %s22, 1
      %p107 = por %p105, %p106
      %p108 = scmp.ne.s32.totalorder %s99, %s100
      %p109 = scmp.eq.s32.totalorder %s22, 0
      %p110 = por %p108, %p109
      %p111 = scmp.ne.s32.totalorder %s99, %s100
      %p112 = scmp.eq.s32.totalorder %s23, 1
      %p113 = por %p111, %p112
      %p115 = scmp.ne.s32.totalorder %s100, %s114
      %p116 = scmp.eq.s32.totalorder %s23, 0
      %p117 = por %p115, %p116
      %s119 = sadd.s32 %s118, 1
      %p122 = scmp.eq.s32.totalorder %s17, 1
      %p123 = scmp.ne.s32.totalorder %s118, %s120
      %p124 = scmp.eq.s32.totalorder %s17, 0
      %p125 = por %p123, %p124
      %p126 = scmp.ne.s32.totalorder %s118, %s120
      %p127 = scmp.eq.s32.totalorder %s22, 1
      %p128 = por %p126, %p127
      %p129 = scmp.ne.s32.totalorder %s120, %s121
      %p130 = scmp.eq.s32.totalorder %s22, 0
      %p131 = por %p129, %p130
      %p132 = scmp.ne.s32.totalorder %s120, %s121
      %p133 = scmp.eq.s32.totalorder %s23, 1
      %p134 = por %p132, %p133
      %p136 = scmp.ne.s32.totalorder %s121, %s135
      %p137 = scmp.eq.s32.totalorder %s23, 0
      %p138 = por %p136, %p137
      %s139 = ssub.s32 %s24, %s36
      %s140 = ssub.s32 %s25, %s32
      %s141 = sor.u32 %s139, %s140
      %p142 = scmp.eq.s32.totalorder %s141, 0
      %s144 = sadd.s32 %s143, 1
      %s145 = scalar_select %p142, %s143, %s144
      %p148 = pneg %p142
      %p149 = scmp.eq.s32.totalorder %s17, 1
      %p150 = por %p148, %p149
      %p151 = scmp.ne.s32.totalorder %s143, %s146
      %p152 = scmp.eq.s32.totalorder %s17, 0
      %p153 = por %p151, %p152
      %p154 = scmp.ne.s32.totalorder %s143, %s146
      %p155 = scmp.eq.s32.totalorder %s22, 1
      %p156 = por %p154, %p155
      %p157 = scmp.ne.s32.totalorder %s146, %s147
      %p158 = scmp.eq.s32.totalorder %s22, 0
      %p159 = por %p157, %p158
      %p160 = scmp.ne.s32.totalorder %s146, %s147
      %p161 = scmp.eq.s32.totalorder %s23, 1
      %p162 = por %p160, %p161
      %p164 = scmp.ne.s32.totalorder %s147, %s163
      %p165 = scmp.eq.s32.totalorder %s23, 0
      %p166 = por %p164, %p165
      %p167 = scmp.le.s32.totalorder 1, %s17
      %p168 = scmp.lt.s32.totalorder %s17, 3
      %p169 = pnand %p167, %p168
      %p170 = pneg %p169
      // Predicated region
      $region9: #{tpu_custom_call.1} parent=5 // pred_check
        _
      $region10: #{tpu_custom_call.1} parent=5 // pred_check_branch
        %172 = sbr.rel (%p169) target = $region12
      $region11: #{tpu_custom_call.1} parent=5 // pred_region
        %s173 = ssub.s32 %s17, 1
        // Predicated region
        $region13: #{tpu_custom_call.1} parent=11 // pred_check
          %p174 = pneg %p110
        $region14: #{tpu_custom_call.1} parent=11 // pred_check_branch
          %176 = sbr.rel (%p174) target = $region16
        $region15: #{tpu_custom_call.1} parent=11 // pred_region
          %178 = vsyncadd [#allocation6], 0
          %s179 = sshll.u32 %s2, 4
          %s180 = int_to_ptr.hbm [resolvable:$true] %s179
          %s181 = sshll.u32 [#allocation5], 4
          %s182 = int_to_ptr.vmem [resolvable:$true] %s181
          %187 = dma.hbm_to_vmem [thread:$0]  %s180, 128, %s182, [#allocation6], 64, 64, 4
        $region16: #{tpu_custom_call.1} parent=11 // pred_fallthru
          _
        // Predicated region
        $region17: #{tpu_custom_call.1} parent=11 // pred_check
          %p188 = pneg %p131
        $region18: #{tpu_custom_call.1} parent=11 // pred_check_branch
          %190 = sbr.rel (%p188) target = $region20
        $region19: #{tpu_custom_call.1} parent=11 // pred_region
          _
        $region20: #{tpu_custom_call.1} parent=11 // pred_fallthru
          _
      $region12: #{tpu_custom_call.1} parent=5 // pred_fallthru
        _
      %p191 = scmp.lt.s32.totalorder %s17, 2
      // Predicated region
      $region21: #{tpu_custom_call.1} parent=5 // pred_check
        %p192 = pneg %p191
      $region22: #{tpu_custom_call.1} parent=5 // pred_check_branch
        %194 = sbr.rel (%p192) target = $region24
      $region23: #{tpu_custom_call.1} parent=5 // pred_region
        // Predicated region
        $region25: #{tpu_custom_call.1} parent=23 // pred_check
          %p195 = pneg %p51
        $region26: #{tpu_custom_call.1} parent=23 // pred_check_branch
          %197 = sbr.rel (%p195) target = $region28
        $region27: #{tpu_custom_call.1} parent=23 // pred_region
          %s198 = smul.u32 3, %s25
          %s199 = ssub.s32 4, %s198
          %p200 = scmp.lt.s32.totalorder %s199, 3
          %s201 = scalar_select %p200, %s199, 3
          %s202 = smul.u32 2, %s201
          %p203 = scmp.lt.s32.totalorder %s24, 1
          %s204 = scalar_select %p203, %s24, 1
          %p205 = scmp.lt.s32.totalorder %s198, 3
          %s206 = scalar_select %p205, %s198, 3
          %s207 = smul.addr %s204, 4
          %s208 = sadd.s32 %s206, %s207
          %s209 = smul.addr %s208, 2
          %s210 = scalar_lea.vmem %s0, %s209
          %s211 = smul.u32 3, %s25
          %s212 = ssub.s32 4, %s211
          %p213 = scmp.lt.s32.totalorder %s212, 3
          %s214 = scalar_select %p213, %s212, 3
          %s215 = smul.u32 2, %s214
        $region28: #{tpu_custom_call.1} parent=23 // pred_fallthru
          _
        // Predicated region
        $region29: #{tpu_custom_call.1} parent=23 // pred_check
          %p216 = pneg %p83
        $region30: #{tpu_custom_call.1} parent=23 // pred_check_branch
          %218 = sbr.rel (%p216) target = $region32
        $region31: #{tpu_custom_call.1} parent=23 // pred_region
          %s219 = sand.u32 %s73, 1
          %s220 = scalar_lea.sflag [#allocation3], %s219
          %s221 = sand.u32 %s73, 1
          %s222 = smul.addr %s221, 2
          %s223 = scalar_lea.vmem [#allocation2], %s222
          %s224 = sadd.s32 %s25, 1
          %s225 = smul.u32 %s224, 3
          %227 = vsyncadd %s220, 0
          %s228 = smul.addr %s24, 4
          %s229 = sadd.s32 %s225, %s228
          %s230 = smul.addr %s229, 2
          %s231 = scalar_lea.hbm %s1, %s230
          %s233 = sshll.u32 %s231, 4
          %s234 = int_to_ptr.hbm [resolvable:$true] %s233
          %s235 = sshll.u32 %s223, 4
          %s236 = int_to_ptr.vmem [resolvable:$true] %s235
          %238 = dma.hbm_to_vmem [thread:$0]  %s234, 32, %s236, %s220
        $region32: #{tpu_custom_call.1} parent=23 // pred_fallthru
          _
      $region24: #{tpu_custom_call.1} parent=5 // pred_fallthru
        _
      %p239 = scmp.le.s32.totalorder 1, %s17
      %p240 = scmp.lt.s32.totalorder %s17, 3
      %p241 = pnand %p239, %p240
      %p242 = pneg %p241
      // Predicated region
      $region33: #{tpu_custom_call.1} parent=5 // pred_check
        _
      $region34: #{tpu_custom_call.1} parent=5 // pred_check_branch
        %244 = sbr.rel (%p241) target = $region36
      $region35: #{tpu_custom_call.1} parent=5 // pred_region
        %s245 = ssub.s32 %s17, 1
        %s246 = sand.u32 %s76, 1
        %s247 = scalar_lea.sflag [#allocation3], %s246
        %s248 = sand.u32 %s76, 1
        %s249 = smul.addr %s248, 2
        %s250 = scalar_lea.vmem [#allocation2], %s249
        // Predicated region
        $region37: #{tpu_custom_call.1} parent=35 // pred_check
          %p251 = pneg %p89
        $region38: #{tpu_custom_call.1} parent=35 // pred_check_branch
          %253 = sbr.rel (%p251) target = $region40
        $region39: #{tpu_custom_call.1} parent=35 // pred_region
          %255 = dma.done %s247, 32
        $region40: #{tpu_custom_call.1} parent=35 // pred_fallthru
          _
        // Predicated region
        $region41: #{tpu_custom_call.1} parent=35 // pred_check
          %p256 = pneg %p110
        $region42: #{tpu_custom_call.1} parent=35 // pred_check_branch
          %258 = sbr.rel (%p256) target = $region44
        $region43: #{tpu_custom_call.1} parent=35 // pred_region
          %260 = dma.done [#allocation6], 128
        $region44: #{tpu_custom_call.1} parent=35 // pred_fallthru
          _
        %s261 = smul.u32 3, %s27
        %s262 = ssub.s32 4, %s261
        %p263 = scmp.lt.s32.totalorder %s262, 3
        %s264 = scalar_select %p263, %s262, 3
        %s265 = smul.u32 2, %s264
        %p266 = scmp.lt.s32.totalorder %s26, 1
        %s267 = scalar_select %p266, %s26, 1
        %p268 = scmp.lt.s32.totalorder %s261, 3
        %s269 = scalar_select %p268, %s261, 3
        %s270 = smul.addr %s267, 4
        %s271 = sadd.s32 %s269, %s270
        %s272 = smul.addr %s271, 2
        %s273 = scalar_lea.vmem %s0, %s272
        %p274 = pneg %p57
        %p275 = pneg %p54
        %s276 = sand.u32 %s76, 1
        %s277 = scalar_lea.sflag [#allocation3], %s276
        %s278 = sand.u32 %s76, 1
        %s279 = smul.addr %s278, 2
        %s280 = scalar_lea.vmem [#allocation2], %s279
        %p281 = pneg %p89
        %p282 = pneg %p86
        %p283 = pneg %p110
        %p284 = pneg %p107
        %p285 = pneg %p131
        %p286 = pneg %p128
        %p287 = pneg %p159
        %p288 = pneg %p156
        %s289 = sand.u32 %s146, 1
        %s290 = scalar_lea.sflag [#allocation4], %s289
        %s291 = sand.u32 %s146, 1
        %s292 = smul.addr %s291, 48
        %s293 = scalar_lea.vmem [#allocation7], %s292
        %s294 = smul.u32 3, %s27
        %s295 = ssub.s32 4, %s294
        %p296 = scmp.lt.s32.totalorder %s295, 3
        %s297 = scalar_select %p296, %s295, 3
        %s298 = smul.u32 2, %s297
        %p299 = scmp.lt.s32.totalorder %s26, 1
        %s300 = scalar_select %p299, %s26, 1
        %p301 = scmp.lt.s32.totalorder %s294, 3
        %s302 = scalar_select %p301, %s294, 3
        %s303 = smul.addr %s300, 4
        %s304 = sadd.s32 %s302, %s303
        %s305 = smul.addr %s304, 2
        %s306 = scalar_lea.vmem %s0, %s305
        %s307 = smul.u32 3, %s27
        %s308 = ssub.s32 4, %s307
        %p309 = scmp.lt.s32.totalorder %s308, 3
        %s310 = scalar_select %p309, %s308, 3
        %s311 = smul.u32 2, %s310
        %s312 = sadd.s32 %s27, 1
        %s313 = smul.u32 %s312, 3
        %s314 = smul.u32 3, %s27
        %v316 = vld [vmem:[%s306] sm:$0x3f]
        %v317 = vld [vmem:[%s250] sm:$0x3]
        %319 = vst [vmem:[#allocation1] ss:$4 sm:$0xff] %v316
        %v320 = vld.sshfl [vmem:[#allocation1] sm:$0xff pattern:$0x73625140]
        %v322 = vld.sshfl [vmem:[#allocation1 + $0x8] sm:$0xff pattern:$0x73625140]
        %v324 = vld.sshfl [vmem:[#allocation1 + $0x10] sm:$0xff pattern:$0x73625140]
        %v327 = vrot.slane %v320, 6
        %v328 = vrot.slane %v322, 6
        %v329 = vrot.slane %v324, 6
        %v330 = vrot.slane %v317, 6
        %331 = vrot.lane.b32.xlu0 %v327, 127
        %v332 = vpop.permute.xlu0 %331
        %333 = vrot.lane.b32.xlu0 %v328, 127
        %v334 = vpop.permute.xlu0 %333
        %335 = vrot.lane.b32.xlu0 %v329, 127
        %v336 = vpop.permute.xlu0 %335
        %337 = vrot.lane.b32.xlu0 %v330, 127
        %v338 = vpop.permute.xlu0 %337
        %vm339 = vcmask 1039360
        %v340 = vsel %vm339, %v332, %v334
        %v341 = vsel %vm339, %v334, %v336
        %v342 = vsel %vm339, %v336, %v338
        %v343 = vrot.slane %v320, 4
        %v344 = vrot.slane %v322, 4
        %v345 = vrot.slane %v324, 4
        %v346 = vrot.slane %v317, 4
        %347 = vrot.lane.b32.xlu0 %v343, 126
        %v348 = vpop.permute.xlu0 %347
        %349 = vrot.lane.b32.xlu0 %v344, 126
        %v350 = vpop.permute.xlu0 %349
        %351 = vrot.lane.b32.xlu0 %v345, 126
        %v352 = vpop.permute.xlu0 %351
        %353 = vrot.lane.b32.xlu0 %v346, 126
        %v354 = vpop.permute.xlu0 %353
        %vm355 = vcmask 1031168
        %v356 = vsel %vm355, %v348, %v350
        %v357 = vsel %vm355, %v350, %v352
        %v358 = vsel %vm355, %v352, %v354
        %v359 = vrot.slane %v320, 2
        %v360 = vrot.slane %v322, 2
        %v361 = vrot.slane %v324, 2
        %v362 = vrot.slane %v317, 2
        %363 = vrot.lane.b32.xlu0 %v359, 110
        %v364 = vpop.permute.xlu0 %363
        %365 = vrot.lane.b32.xlu0 %v360, 110
        %v366 = vpop.permute.xlu0 %365
        %367 = vrot.lane.b32.xlu0 %v361, 110
        %v368 = vpop.permute.xlu0 %367
        %369 = vrot.lane.b32.xlu0 %v362, 110
        %v370 = vpop.permute.xlu0 %369
        %vm371 = vcmask 900096
        %v372 = vsel %vm371, %v364, %v366
        %v373 = vsel %vm371, %v366, %v368
        %v374 = vsel %vm371, %v368, %v370
        %375 = vrot.lane.b32.xlu0 %v320, 109
        %v376 = vpop.permute.xlu0 %375
        %377 = vrot.lane.b32.xlu0 %v322, 109
        %v378 = vpop.permute.xlu0 %377
        %379 = vrot.lane.b32.xlu0 %v324, 109
        %v380 = vpop.permute.xlu0 %379
        %381 = vrot.lane.b32.xlu0 %v317, 109
        %v382 = vpop.permute.xlu0 %381
        %vm383 = vcmask 891904
        %v384 = vsel %vm383, %v376, %v378
        %v385 = vsel %vm383, %v378, %v380
        %v386 = vsel %vm383, %v380, %v382
        %387 = vrot.lane.b32.xlu0 %v327, 108
        %v388 = vpop.permute.xlu0 %387
        %389 = vrot.lane.b32.xlu0 %v328, 108
        %v390 = vpop.permute.xlu0 %389
        %391 = vrot.lane.b32.xlu0 %v329, 108
        %v392 = vpop.permute.xlu0 %391
        %393 = vrot.lane.b32.xlu0 %v330, 108
        %v394 = vpop.permute.xlu0 %393
        %vm395 = vcmask 883712
        %v396 = vsel %vm395, %v388, %v390
        %v397 = vsel %vm395, %v390, %v392
        %v398 = vsel %vm395, %v392, %v394
        %399 = vrot.lane.b32.xlu0 %v343, 92
        %v400 = vpop.permute.xlu0 %399
        %401 = vrot.lane.b32.xlu0 %v344, 92
        %v402 = vpop.permute.xlu0 %401
        %403 = vrot.lane.b32.xlu0 %v345, 92
        %v404 = vpop.permute.xlu0 %403
        %405 = vrot.lane.b32.xlu0 %v346, 92
        %v406 = vpop.permute.xlu0 %405
        %vm407 = vcmask 752640
        %v408 = vsel %vm407, %v400, %v402
        %v409 = vsel %vm407, %v402, %v404
        %v410 = vsel %vm407, %v404, %v406
        %411 = vrot.lane.b32.xlu0 %v359, 91
        %v412 = vpop.permute.xlu0 %411
        %413 = vrot.lane.b32.xlu0 %v360, 91
        %v414 = vpop.permute.xlu0 %413
        %415 = vrot.lane.b32.xlu0 %v361, 91
        %v416 = vpop.permute.xlu0 %415
        %417 = vrot.lane.b32.xlu0 %v362, 91
        %v418 = vpop.permute.xlu0 %417
        %vm419 = vcmask 744448
        %v420 = vsel %vm419, %v412, %v414
        %v421 = vsel %vm419, %v414, %v416
        %v422 = vsel %vm419, %v416, %v418
        %423 = vrot.lane.b32.xlu0 %v320, 90
        %v424 = vpop.permute.xlu0 %423
        %425 = vrot.lane.b32.xlu0 %v322, 90
        %v426 = vpop.permute.xlu0 %425
        %427 = vrot.lane.b32.xlu0 %v324, 90
        %v428 = vpop.permute.xlu0 %427
        %429 = vrot.lane.b32.xlu0 %v317, 90
        %v430 = vpop.permute.xlu0 %429
        %vm431 = vcmask 736256
        %v432 = vsel %vm431, %v424, %v426
        %v433 = vsel %vm431, %v426, %v428
        %v434 = vsel %vm431, %v428, %v430
        %vm435 = vcmask 1041408
        %v437 = vsel %vm435, %v320, %v340
        %v439 = vsel %vm435, %v322, %v341
        %v441 = vsel %vm435, %v324, %v342
        %vm442 = vcmask 1043456
        %v444 = vsel %vm442, %v437, %v356
        %v446 = vsel %vm442, %v439, %v357
        %v448 = vsel %vm442, %v441, %v358
        %vm449 = vcmask 1045504
        %v451 = vsel %vm449, %v444, %v372
        %v454 = vsel %vm449, %v446, %v373
        %v457 = vsel %vm449, %v448, %v374
        %v461 = vsel %vm435, %v384, %v396
        %v464 = vsel %vm435, %v385, %v397
        %v467 = vsel %vm435, %v386, %v398
        %v469 = vsel %vm442, %v461, %v408
        %v471 = vsel %vm442, %v464, %v409
        %v473 = vsel %vm442, %v467, %v410
        %v475 = vsel %vm449, %v469, %v420
        %v478 = vsel %vm449, %v471, %v421
        %v481 = vsel %vm449, %v473, %v422
        %v483 = vld [vmem:[#allocation5] sm:$0xf]
        %v484 = vld [vmem:[#allocation5 + $0x4] sm:$0xf]
        %v485 = vld [vmem:[%s3] sm:$0xff]
        %v486 = vld [vmem:[%s3 + $0x8] sm:$0xff]
        %488 = vset.pattern.permute.xlu0 0
        %489 = vperm.xlu0 %488, %v485
        %v490 = vpop.permute.xlu0 %489
        %493 = vset.pattern.permute.xlu0 0
        %494 = vperm.xlu0 %493, %v486
        %v495 = vpop.permute.xlu0 %494
        %v499 = vunpack.c.l.b16 %v483
        %v500 = vunpack.c.l.b16 %v484
        %v501 = vpack.c.b16 %v500, %v499
        %vm502 = vcmask 293888
        %v504 = vsel %vm502, %v501, 0
        %v507 = vsel %vm435, %v432, 0
        %v510 = vsel %vm435, %v433, 0
        %v513 = vsel %vm435, %v434, 0
        %515 = vmatpush.bf16.msra.mxu0 0
        %516 = vmatpush.bf16.msra.mxu0 0
        %517 = vmatpush.bf16.msra.mxu0 0
        %518 = vmatpush.bf16.msra.mxu0 0
        %519 = vmatpush.bf16.msra.mxu0 0
        %520 = vmatpush.bf16.msra.mxu0 %v507
        %521 = vmatpush.bf16.msra.mxu0 %v475
        %522 = vmatpush.bf16.msra.mxu0 %v451
        %523 = vmatmul.bf16.gmra.mxu0 %v504
        %v524 = vpop.f32.mrf.mxu0
        %v525 = vadd.f32 %v490, %v524
        %v526 = vpop.f32.mrf.mxu0
        %v527 = vadd.f32 %v495, %v526
        %528 = vdwg.mxu0
        %529 = vmatpush.bf16.msra.mxu0 0
        %530 = vmatpush.bf16.msra.mxu0 0
        %531 = vmatpush.bf16.msra.mxu0 0
        %532 = vmatpush.bf16.msra.mxu0 0
        %533 = vmatpush.bf16.msra.mxu0 0
        %534 = vmatpush.bf16.msra.mxu0 %v510
        %535 = vmatpush.bf16.msra.mxu0 %v478
        %536 = vmatpush.bf16.msra.mxu0 %v454
        %537 = vmatmul.bf16.gmra.mxu0 %v504
        %v538 = vpop.f32.mrf.mxu0
        %v539 = vadd.f32 %v490, %v538
        %v540 = vpop.f32.mrf.mxu0
        %v541 = vadd.f32 %v495, %v540
        %542 = vdwg.mxu0
        %543 = vmatpush.bf16.msra.mxu0 0
        %544 = vmatpush.bf16.msra.mxu0 0
        %545 = vmatpush.bf16.msra.mxu0 0
        %546 = vmatpush.bf16.msra.mxu0 0
        %547 = vmatpush.bf16.msra.mxu0 0
        %548 = vmatpush.bf16.msra.mxu0 %v513
        %549 = vmatpush.bf16.msra.mxu0 %v481
        %550 = vmatpush.bf16.msra.mxu0 %v457
        %551 = vmatmul.bf16.gmra.mxu0 %v504
        %v552 = vpop.f32.mrf.mxu0
        %v553 = vadd.f32 %v490, %v552
        %v554 = vpop.f32.mrf.mxu0
        %v555 = vadd.f32 %v495, %v554
        %556 = vdwg.mxu0
        %557 = vst [vmem:[%s293] sm:$0xff] %v525
        %558 = vst [vmem:[%s293 + $0x8] sm:$0xff] %v539
        %559 = vst [vmem:[%s293 + $0x10] sm:$0xff] %v553
        %560 = vst [vmem:[%s293 + $0x18] sm:$0xff] %v527
        %561 = vst [vmem:[%s293 + $0x20] sm:$0xff] %v541
        %562 = vst [vmem:[%s293 + $0x28] sm:$0xff] %v555
        %s563 = sand.u32 %s146, 1
        %s564 = scalar_lea.sflag [#allocation4], %s563
        %s565 = sand.u32 %s146, 1
        %s566 = smul.addr %s565, 48
        %s567 = scalar_lea.vmem [#allocation7], %s566
        // Predicated region
        $region45: #{tpu_custom_call.1} parent=35 // pred_check
          %p568 = pneg %p156
        $region46: #{tpu_custom_call.1} parent=35 // pred_check_branch
          %570 = sbr.rel (%p568) target = $region48
        $region47: #{tpu_custom_call.1} parent=35 // pred_region
          %s571 = smul.u32 3, %s27
          %573 = vsyncadd %s564, 0
          %s574 = smul.addr %s26, 6
          %s575 = sadd.s32 %s571, %s574
          %s576 = smul.addr %s575, 8
          %s577 = scalar_lea.hbm %s4, %s576
          %s578 = sshll.u32 %s567, 4
          %s579 = int_to_ptr.vmem [resolvable:$true] %s578
          %s580 = sshll.u32 %s577, 4
          %s581 = int_to_ptr.hbm [resolvable:$true] %s580
          %586 = dma.vmem_to_hbm [thread:$0]  %s579, 768, %s581, %s564, 384, 384, 24
        $region48: #{tpu_custom_call.1} parent=35 // pred_fallthru
          _
      $region36: #{tpu_custom_call.1} parent=5 // pred_fallthru
        _
      %p587 = scmp.le.s32.totalorder 2, %s17
      // Predicated region
      $region49: #{tpu_custom_call.1} parent=5 // pred_check
        %p588 = pneg %p587
      $region50: #{tpu_custom_call.1} parent=5 // pred_check_branch
        %590 = sbr.rel (%p588) target = $region52
      $region51: #{tpu_custom_call.1} parent=5 // pred_region
        %s591 = ssub.s32 %s17, 2
        // Predicated region
        $region53: #{tpu_custom_call.1} parent=51 // pred_check
          %p592 = pneg %p162
        $region54: #{tpu_custom_call.1} parent=51 // pred_check_branch
          %594 = sbr.rel (%p592) target = $region56
        $region55: #{tpu_custom_call.1} parent=51 // pred_region
          %s595 = sand.u32 %s147, 1
          %s596 = scalar_lea.sflag [#allocation4], %s595
          %s597 = sand.u32 %s147, 1
          %s598 = smul.addr %s597, 48
          %s599 = scalar_lea.vmem [#allocation7], %s598
          %601 = dma.done %s596, 768
        $region56: #{tpu_custom_call.1} parent=51 // pred_fallthru
          _
      $region52: #{tpu_custom_call.1} parent=5 // pred_fallthru
        _
    $region6: #{tpu_custom_call.1} parent=1 // loop_footer
      %s21 = sadd.s32 1, %s17
    $region7: #{tpu_custom_call.1} parent=1 // loop_footer_branch
      %16 = sbr.rel target = $region3
    $region8: #{tpu_custom_call.1} parent=1 // loop_exit
      _
    %602 = vsyncpa [#allocation3], 1
    %s603 = scalar_lea.sflag [#allocation3], 1
    %604 = vsyncpa %s603, 1
    %605 = vsyncpa [#allocation6], 1
    %606 = vsyncpa [#allocation4], 1
    %s607 = scalar_lea.sflag [#allocation4], 1
    %608 = vsyncpa %s607, 1

</llo_original>
